<compile_context>
chip_gen: v7x
topology: tpu7x:2x2x1
jax: 0.10.0
libtpu: 0.0.40
codegen_flags: <defaults>
</compile_context>

<pallas_src>
import jax
import jax.numpy as jnp
from jax.experimental import pallas as pl
from jax.experimental.pallas import tpu as pltpu


def _rrmvl_fused_kernel(x_ref, w_ref, b_ref, o_ref):
    # Single fused affine map: (TB, IN) @ (IN, OUT) + (1, OUT)
    y = jnp.dot(x_ref[...], w_ref[...], preferred_element_type=jnp.float32)
    o_ref[...] = (y + b_ref[...]).astype(o_ref.dtype)


def fuse_params(w1, b1, w2, b2):
    """Fold Linear(in->rank) and Linear(rank->out) into one affine map.

    Done once at param-prep time (outside the kernel):
        w_eff = w1 @ w2        (in_dim, out_dim)
        b_eff = b1 @ w2 + b2   (1, out_dim)
    """
    w_eff = jnp.dot(w1, w2, preferred_element_type=jnp.float32)
    b_eff = jnp.dot(b1, w2, preferred_element_type=jnp.float32) + b2
    return w_eff, b_eff


def rrmvl_forward(x, w_eff, b_eff, output_shape, *, batch_tile=256):
    """x: (B, H, W) float32. Returns (B, output_shape[0], output_shape[1])."""
    B = x.shape[0]
    in_dim = x.shape[1] * x.shape[2]
    out_dim = output_shape[0] * output_shape[1]
    x_flat = x.reshape(B, in_dim)
    out_struct = jax.ShapeDtypeStruct((B, out_dim), jnp.float32)

    use_grid = (B % batch_tile == 0) and (B // batch_tile >= 2)

    if use_grid:
        # Batch-tiled path: x/out tiled over B, fused weight & bias resident
        # across the grid (constant index_map).  "parallel" lets the two
        # TensorCores on v7x each take half the batch.
        out = pl.pallas_call(
            _rrmvl_fused_kernel,
            out_shape=out_struct,
            grid=(B // batch_tile,),
            in_specs=[
                pl.BlockSpec((batch_tile, in_dim), lambda i: (i, 0)),
                pl.BlockSpec((in_dim, out_dim), lambda i: (0, 0)),
                pl.BlockSpec((1, out_dim), lambda i: (0, 0)),
            ],
            out_specs=pl.BlockSpec((batch_tile, out_dim), lambda i: (i, 0)),
            compiler_params=pltpu.CompilerParams(
                dimension_semantics=("parallel",)),
        )(x_flat, w_eff, b_eff)
    else:
        # Tiny / irregular batch: gridless call, whole arrays in VMEM.
        vmem = pltpu.MemorySpace.VMEM
        out = pl.pallas_call(
            _rrmvl_fused_kernel,
            out_shape=out_struct,
            in_specs=[
                pl.BlockSpec(memory_space=vmem),
                pl.BlockSpec(memory_space=vmem),
                pl.BlockSpec(memory_space=vmem),
            ],
            out_specs=pl.BlockSpec(memory_space=vmem),
        )(x_flat, w_eff, b_eff)

    # Free contiguous view, no compute.
    return out.reshape(B, output_shape[0], output_shape[1])


def init_params(key, input_shape, rank, output_shape):
    """Deterministic parameter init (PyTorch Linear-style uniform bounds)."""
    in_dim = input_shape[0] * input_shape[1]
    out_dim = output_shape[0] * output_shape[1]
    k1, k2, k3, k4 = jax.random.split(key, 4)
    bound1 = 1.0 / (in_dim ** 0.5)
    bound2 = 1.0 / (rank ** 0.5)
    # Stored as (in, out) so the math is x @ W  (== x @ torch_weight.T).
    w1 = jax.random.uniform(k1, (in_dim, rank), jnp.float32, -bound1, bound1)
    b1 = jax.random.uniform(k2, (1, rank), jnp.float32, -bound1, bound1)
    w2 = jax.random.uniform(k3, (rank, out_dim), jnp.float32, -bound2, bound2)
    b2 = jax.random.uniform(k4, (1, out_dim), jnp.float32, -bound2, bound2)
    return w1, b1, w2, b2


def _reference(x, w1, b1, w2, b2, output_shape):
    """Un-fused plain-JAX reference matching the PyTorch module."""
    B = x.shape[0]
    x_flat = x.reshape(B, -1)
    y = (x_flat @ w1 + b1) @ w2 + b2
    return y.reshape(B, output_shape[0], output_shape[1])


if __name__ == "__main__":
    input_shape = (16, 16)
    rank = 32
    output_shape = (8, 8)

    key = jax.random.PRNGKey(0)
    kx1, kx2, kp = jax.random.split(key, 3)
    w1, b1, w2, b2 = init_params(kp, input_shape, rank, output_shape)
    w_eff, b_eff = fuse_params(w1, b1, w2, b2)

    # --- Case 1: tiny batch (B=2) -> gridless VMEM path ---------------------
    B_small = 2
    x_small = jax.random.normal(kx1, (B_small, *input_shape), jnp.float32)
    out_small = jax.block_until_ready(
        rrmvl_forward(x_small, w_eff, b_eff, output_shape))
    ref_small = _reference(x_small, w1, b1, w2, b2, output_shape)
    assert out_small.shape == (B_small, *output_shape)
    assert jnp.allclose(out_small, ref_small, atol=1e-4, rtol=1e-4)

    # --- Case 2: batched (B=512) -> batch-tiled "parallel" grid path --------
    B_big = 512
    x_big = jax.random.normal(kx2, (B_big, *input_shape), jnp.float32)
    out_big = jax.block_until_ready(
        rrmvl_forward(x_big, w_eff, b_eff, output_shape, batch_tile=256))
    ref_big = _reference(x_big, w1, b1, w2, b2, output_shape)
    assert out_big.shape == (B_big, *output_shape)
    assert jnp.allclose(out_big, ref_big, atol=1e-4, rtol=1e-4)

    print("KERNEL_OK")
</pallas_src>

<mosaic_0001>
module attributes {stable_mosaic.version = 11 : i64} {
  func.func @_rrmvl_fused_kernel(%arg0: memref<2x256xf32, #tpu.memory_space<vmem>>, %arg1: memref<256x64xf32, #tpu.memory_space<vmem>>, %arg2: memref<1x64xf32, #tpu.memory_space<vmem>>, %arg3: memref<2x64xf32, #tpu.memory_space<vmem>>) attributes {dimension_semantics = [], scalar_prefetch = 0 : i64, scratch_operands = 0 : i64, tpu.core_type = #tpu.core_type<tc>} {
    %c0 = arith.constant 0 : index
    %c0_0 = arith.constant 0 : index
    %0 = vector.load %arg0[%c0, %c0_0] : memref<2x256xf32, #tpu.memory_space<vmem>>, vector<2x256xf32>
    %c0_1 = arith.constant 0 : index
    %c0_2 = arith.constant 0 : index
    %1 = vector.load %arg1[%c0_1, %c0_2] : memref<256x64xf32, #tpu.memory_space<vmem>>, vector<256x64xf32>
    %cst = arith.constant dense<0.000000e+00> : vector<2x64xf32>
    %2 = tpu.matmul %0, %1, %cst {dimension_numbers = #tpu.dot_dimension_numbers<[1], [0], [0], [1], [0, 0, 1, 1], [], []>} : vector<2x256xf32>, vector<256x64xf32>, vector<2x64xf32> -> vector<2x64xf32>
    %c0_3 = arith.constant 0 : index
    %c0_4 = arith.constant 0 : index
    %3 = vector.load %arg2[%c0_3, %c0_4] : memref<1x64xf32, #tpu.memory_space<vmem>>, vector<1x64xf32>
    %4 = vector.broadcast %3 : vector<1x64xf32> to vector<2x64xf32>
    %5 = arith.addf %2, %4 : vector<2x64xf32>
    %c0_5 = arith.constant 0 : index
    %c0_6 = arith.constant 0 : index
    %6 = vector.load %arg3[%c0_5, %c0_6] : memref<2x64xf32, #tpu.memory_space<vmem>>, vector<2x64xf32>
    tpu.vector_store %arg3[%c0_5, %c0_6], %5 {strides = array<i32>} : memref<2x64xf32, #tpu.memory_space<vmem>>, vector<2x64xf32>,
    return
  }
}

</mosaic_0001>

<llo_original>
// kernel: tpu_custom_call.1
$region0: #{tpu_custom_call.1}
  #allocation0 [shape = 'u32[]', space=smem, size = 0x4, offset = 0x4, fixed_abs, tag = 'smem constant byte address 0x4 - core index']
  #allocation1 [shape = 'u32[144,128]{1,0:T(1,128)}', space=vmem, size = 0x12000, scoped, tag = 'internal scratch']
  %s0 = inlined_call_operand.vmem [shape: f32[2,256], index: 0, kind: input, shape index: {}]
  %s1 = inlined_call_operand.vmem [shape: f32[256,64], index: 1, kind: input, shape index: {}]
  %s2 = inlined_call_operand.vmem [shape: f32[1,64], index: 2, kind: input, shape index: {}]
  %s3 = inlined_call_operand.hbm [shape: f32[2,64], index: 3, kind: output, shape index: {}]
  %s4 = sld [smem:[#allocation0]]
  $region22: #{tpu_custom_call.1} parent=0
    _
  %s6 = ssub.s32 1, %s4
  %s7 = scalar_select 0, %s6, %s4
  $region1: #{tpu_custom_call.1} parent=0
    #allocation2 [shape = 'u8[1024]{0}', space=vmem, size = 0x400, scoped, tag = 'output window, operand 0, single buffered']
    #allocation3 [shape = 's32[1]{0}', space=sflag, size = 0x4, scoped, tag = 'scoped memory for tpu_custom_call.1']
    %8 = vsyncpa [#allocation3], 0
    // Predicated region
    $region2: #{tpu_custom_call.1} parent=1 // pred_check
      _
    $region3: #{tpu_custom_call.1} parent=1 // pred_check_branch
      %10 = sbr.rel (0) target = $region5
    $region4: #{tpu_custom_call.1} parent=1 // pred_region
      _
    $region5: #{tpu_custom_call.1} parent=1 // pred_fallthru
      _
    // Predicated region
    $region6: #{tpu_custom_call.1} parent=1 // pred_check
      _
    $region7: #{tpu_custom_call.1} parent=1 // pred_check_branch
      %12 = sbr.rel (0) target = $region9
    $region8: #{tpu_custom_call.1} parent=1 // pred_region
      _
    $region9: #{tpu_custom_call.1} parent=1 // pred_fallthru
      _
    // Predicated region
    $region10: #{tpu_custom_call.1} parent=1 // pred_check
      _
    $region11: #{tpu_custom_call.1} parent=1 // pred_check_branch
      %14 = sbr.rel (0) target = $region13
    $region12: #{tpu_custom_call.1} parent=1 // pred_region
      _
    $region13: #{tpu_custom_call.1} parent=1 // pred_fallthru
      _
    %v15 = vld [vmem:[%s0] sm:$0xf]
    %v16 = vld [vmem:[%s1] sm:$0xff]
    %v17 = vld [vmem:[%s1 + $0x8] sm:$0xff]
    %v18 = vld [vmem:[%s1 + $0x10] sm:$0xff]
    %v19 = vld [vmem:[%s1 + $0x18] sm:$0xff]
    %v20 = vld [vmem:[%s1 + $0x20] sm:$0xff]
    %v21 = vld [vmem:[%s1 + $0x28] sm:$0xff]
    %v22 = vld [vmem:[%s1 + $0x30] sm:$0xff]
    %v23 = vld [vmem:[%s1 + $0x38] sm:$0xff]
    %v24 = vld [vmem:[%s1 + $0x40] sm:$0xff]
    %v25 = vld [vmem:[%s1 + $0x48] sm:$0xff]
    %v26 = vld [vmem:[%s1 + $0x50] sm:$0xff]
    %v27 = vld [vmem:[%s1 + $0x58] sm:$0xff]
    %v28 = vld [vmem:[%s1 + $0x60] sm:$0xff]
    %v29 = vld [vmem:[%s1 + $0x68] sm:$0xff]
    %v30 = vld [vmem:[%s1 + $0x70] sm:$0xff]
    %v31 = vld [vmem:[%s1 + $0x78] sm:$0xff]
    %v32 = vld [vmem:[%s1 + $0x80] sm:$0xff]
    %v33 = vld [vmem:[%s1 + $0x88] sm:$0xff]
    %v34 = vld [vmem:[%s1 + $0x90] sm:$0xff]
    %v35 = vld [vmem:[%s1 + $0x98] sm:$0xff]
    %v36 = vld [vmem:[%s1 + $0xa0] sm:$0xff]
    %v37 = vld [vmem:[%s1 + $0xa8] sm:$0xff]
    %v38 = vld [vmem:[%s1 + $0xb0] sm:$0xff]
    %v39 = vld [vmem:[%s1 + $0xb8] sm:$0xff]
    %v40 = vld [vmem:[%s1 + $0xc0] sm:$0xff]
    %v41 = vld [vmem:[%s1 + $0xc8] sm:$0xff]
    %v42 = vld [vmem:[%s1 + $0xd0] sm:$0xff]
    %v43 = vld [vmem:[%s1 + $0xd8] sm:$0xff]
    %v44 = vld [vmem:[%s1 + $0xe0] sm:$0xff]
    %v45 = vld [vmem:[%s1 + $0xe8] sm:$0xff]
    %v46 = vld [vmem:[%s1 + $0xf0] sm:$0xff]
    %v47 = vld [vmem:[%s1 + $0xf8] sm:$0xff]
    %v48 = vld [vmem:[%s2] sm:$0x1]
    %v50 = vlaneseq
    %v51 = vshrl.u32 %v50, 7
    %v52 = vsub.s32 0, %v51
    %v53 = vrot.slane %v48, %v52
    %v57 = vunpack.c.l.s4 1983009808
    %v58 = vunpack.c.0.s8 %v57
    %v59 = vlaneseq
    %v60 = vshrl.u32 %v59, 7
    %v61 = vsub.s32 %v58, %v60
    %v62 = vrot.slane %v15, %v61
    %v63 = vcombine.high %v62, %v62
    %66 = vmatprep.subr.mxu0 0.0
    %67 = vmatpush1.msra.mxu0 %v16
    %68 = vmatprep.subr.mxu0 0.0
    %69 = vmatpush1.msra.mxu0 %v17
    %70 = vmatprep.subr.mxu0 0.0
    %71 = vmatpush1.msra.mxu0 %v18
    %72 = vmatprep.subr.mxu0 0.0
    %73 = vmatpush1.msra.mxu0 %v19
    %74 = vmatprep.subr.mxu0 0.0
    %75 = vmatpush1.msra.mxu0 %v20
    %76 = vmatprep.subr.mxu0 0.0
    %77 = vmatpush1.msra.mxu0 %v21
    %78 = vmatprep.subr.mxu0 0.0
    %79 = vmatpush1.msra.mxu0 %v22
    %80 = vmatprep.subr.mxu0 0.0
    %81 = vmatpush1.msra.mxu0 %v23
    %82 = vmatprep.subr.mxu0 0.0
    %83 = vmatpush1.msra.mxu0 %v24
    %84 = vmatprep.subr.mxu0 0.0
    %85 = vmatpush1.msra.mxu0 %v25
    %86 = vmatprep.subr.mxu0 0.0
    %87 = vmatpush1.msra.mxu0 %v26
    %88 = vmatprep.subr.mxu0 0.0
    %89 = vmatpush1.msra.mxu0 %v27
    %90 = vmatprep.subr.mxu0 0.0
    %91 = vmatpush1.msra.mxu0 %v28
    %92 = vmatprep.subr.mxu0 0.0
    %93 = vmatpush1.msra.mxu0 %v29
    %94 = vmatprep.subr.mxu0 0.0
    %95 = vmatpush1.msra.mxu0 %v30
    %96 = vmatprep.subr.mxu0 0.0
    %97 = vmatpush1.msra.mxu0 %v31
    %98 = vmatprep.subr.mxu0 0.0
    %99 = vmatpush1.msra.mxu0 %v32
    %100 = vmatprep.subr.mxu0 0.0
    %101 = vmatpush1.msra.mxu0 %v33
    %102 = vmatprep.subr.mxu0 0.0
    %103 = vmatpush1.msra.mxu0 %v34
    %104 = vmatprep.subr.mxu0 0.0
    %105 = vmatpush1.msra.mxu0 %v35
    %106 = vmatprep.subr.mxu0 0.0
    %107 = vmatpush1.msra.mxu0 %v36
    %108 = vmatprep.subr.mxu0 0.0
    %109 = vmatpush1.msra.mxu0 %v37
    %110 = vmatprep.subr.mxu0 0.0
    %111 = vmatpush1.msra.mxu0 %v38
    %112 = vmatprep.subr.mxu0 0.0
    %113 = vmatpush1.msra.mxu0 %v39
    %114 = vmatprep.subr.mxu0 0.0
    %115 = vmatpush1.msra.mxu0 %v40
    %116 = vmatprep.subr.mxu0 0.0
    %117 = vmatpush1.msra.mxu0 %v41
    %118 = vmatprep.subr.mxu0 0.0
    %119 = vmatpush1.msra.mxu0 %v42
    %120 = vmatprep.subr.mxu0 0.0
    %121 = vmatpush1.msra.mxu0 %v43
    %122 = vmatprep.subr.mxu0 0.0
    %123 = vmatpush1.msra.mxu0 %v44
    %124 = vmatprep.subr.mxu0 0.0
    %125 = vmatpush1.msra.mxu0 %v45
    %126 = vmatprep.subr.mxu0 0.0
    %127 = vmatpush1.msra.mxu0 %v46
    %128 = vmatprep.subr.mxu0 0.0
    %129 = vmatpush1.msra.mxu0 %v47
    %130 = vmatprep.mubr.f32.mxu0 %v63
    %131 = vmatmul.mubr.f32.gmra.mrb[0].mxu0 %v62
    %v132 = vpop.f32.mrb[0].mxu0
    %v133 = vadd.f32 %v53, %v132
    %v134 = vpop.f32.mrb[0].mxu0
    %135 = vdwg.mxu0
    %vm136 = vcmask 517120
    %137 = vst.msk [vmem:[#allocation2] sm:$0x3] %vm136, %v133
    // Predicated region
    $region14: #{tpu_custom_call.1} parent=1 // pred_check
      _
    $region15: #{tpu_custom_call.1} parent=1 // pred_check_branch
      %139 = sbr.rel (0) target = $region17
    $region16: #{tpu_custom_call.1} parent=1 // pred_region
      %s141 = ssub.s32 32, 32
      %142 = vsyncadd [#allocation3], %s141
      %s144 = sshll.u32 [#allocation2], 4
      %s145 = int_to_ptr.vmem [resolvable:$true] %s144
      %147 = dma.vmem_to_hbm [thread:$0]  %s145, 32, %s3, [#allocation3]
    $region17: #{tpu_custom_call.1} parent=1 // pred_fallthru
      _
    // Predicated region
    $region18: #{tpu_custom_call.1} parent=1 // pred_check
      _
    $region19: #{tpu_custom_call.1} parent=1 // pred_check_branch
      %149 = sbr.rel (0) target = $region21
    $region20: #{tpu_custom_call.1} parent=1 // pred_region
      %150 = dma.done [#allocation3], 32
    $region21: #{tpu_custom_call.1} parent=1 // pred_fallthru
      _
    %151 = vsyncpa [#allocation3], 1

</llo_original>
